<compile_context>
chip_gen: v7x
topology: tpu7x:2x2x1
jax: 0.10.0
libtpu: 0.0.40
codegen_flags: <defaults>
</compile_context>

<pallas_src>
import functools
import math

import jax
import jax.numpy as jnp
from jax.experimental import pallas as pl
from jax.experimental.pallas import tpu as pltpu


def _round_up(x, m):
    return ((x + m - 1) // m) * m


def _vmem_capacity_bytes():
    try:
        cap = getattr(pltpu.get_tpu_info(), "vmem_capacity_bytes", None)
        if cap:
            return int(cap)
    except Exception:
        pass
    return 64 * 2**20  # conservative (v7x-sized) fallback


def _jaccard_sums_kernel(p_ref, t_ref, inter_ref, sump_ref, sumt_ref, *, rem):
    k = pl.program_id(1)

    # Each batch-block's partial accumulators start fresh at the first lane chunk.
    @pl.when(k == 0)
    def _():
        inter_ref[...] = jnp.zeros_like(inter_ref)
        sump_ref[...] = jnp.zeros_like(sump_ref)
        sumt_ref[...] = jnp.zeros_like(sumt_ref)

    p = p_ref[...].astype(jnp.float32)  # (1, R, chunk)
    t = t_ref[...].astype(jnp.float32)

    if rem:  # static: only compiled in when the last lane chunk is ragged
        lane = jax.lax.broadcasted_iota(jnp.int32, p.shape, dimension=2)
        valid = (lane < rem) | (k != pl.num_programs(1) - 1)
        p = jnp.where(valid, p, 0.0)
        t = jnp.where(valid, t, 0.0)

    inter_ref[...] += jnp.sum(t * p, axis=-1, keepdims=True)
    sump_ref[...] += jnp.sum(p, axis=-1, keepdims=True)
    sumt_ref[...] += jnp.sum(t, axis=-1, keepdims=True)


def weight_jaccard_index(preds, targets, smooth=1e-07, block_bytes=None):
    """preds, targets: (N, C, H, W).  Returns a float32 scalar (weighted IoU)."""
    assert preds.shape == targets.shape
    N, C, H, W = preds.shape
    HW = H * W
    total = N * HW

    p_item = jnp.dtype(preds.dtype).itemsize
    t_item = jnp.dtype(targets.dtype).itemsize
    max_item = max(p_item, t_item)
    min_item = min(p_item, t_item)

    # --- generation-aware per-input block budget -----------------------------
    vmem_cap = _vmem_capacity_bytes()
    if block_bytes is None:
        block_bytes = 8 * 2**20 if vmem_cap >= 96 * 2**20 else 4 * 2**20
    # keep 2 inputs x 2 double-buffers well inside the queried VMEM capacity
    block_bytes = max(16 * 1024, min(block_bytes, vmem_cap // 6))

    # --- dtype-aware channel packing onto sublanes (free row-major reshape) ---
    # (N, C, HW) -> (N, C*pack, HW/pack); packed row r belongs to channel r // pack.
    sub_mult = 8 * max(1, 4 // min_item)  # f32: 8, bf16: 16, int8: 32 sublanes/vreg
    pack = 1
    for m in (sub_mult, 8):
        base = m // math.gcd(C, m)
        if HW % base == 0:
            pack = base
            break
    Cp = C * pack
    Hc = HW // pack

    # --- lane-chunk sizing: ~block_bytes per input, multiple of 128, with a ---
    # --- floor so every per-row DMA run is >= ~512 B --------------------------
    min_lanes = _round_up(max(128, 512 // min_item), 128)
    budget_lanes = max(min_lanes, (block_bytes // (Cp * max_item)) // 128 * 128)
    if Hc <= budget_lanes:
        chunk = Hc  # full lane extent of the array: no 128-multiple requirement
    else:
        chunk = budget_lanes
        if Hc % 128 == 0:
            # Prefer a divisor of Hc near the budget (avoids the tail mask).
            lo = max(min_lanes, (budget_lanes // 2) // 128 * 128)
            d = budget_lanes
            while d >= lo and Hc % d != 0:
                d -= 128
            if d >= lo:
                chunk = d
    nk = pl.cdiv(Hc, chunk)
    rem = Hc % chunk  # 0 -> no in-kernel masking compiled in

    # --- batch several samples per block when a whole (Cp, Hc) row is small ---
    # (folded into the sublane axis; keep >= 2 batch blocks so v7x's two
    #  TensorCores can each take half of the "parallel" batch axis)
    bn = 1
    if chunk >= Hc and N > 1:
        per_n = Cp * Hc * max_item
        max_bn = max(1, block_bytes // per_n)
        for d in range(min(N // 2, max_bn), 0, -1):
            if N % d == 0:
                bn = d
                break
    NB = N // bn
    R = bn * Cp

    p2 = preds.reshape(NB, R, Hc)   # free row-major reshape, no HBM traffic
    t2 = targets.reshape(NB, R, Hc)

    grid = (NB, nk)

    per_pair = R * chunk * (p_item + t_item)
    vmem_limit = int(min(vmem_cap * 3 // 4, max(32 * 2**20, 3 * per_pair)))

    total_elems = N * C * H * W
    cost = pl.CostEstimate(
        flops=4 * total_elems,
        transcendentals=0,
        bytes_accessed=total_elems * (p_item + t_item) + 3 * NB * R * 4,
    )

    acc_shape = jax.ShapeDtypeStruct((NB, R, 1), jnp.float32)
    kernel = functools.partial(_jaccard_sums_kernel, rem=rem)
    inter_p, sump_p, sumt_p = pl.pallas_call(
        kernel,
        out_shape=(acc_shape, acc_shape, acc_shape),
        grid_spec=pltpu.PrefetchScalarGridSpec(
            num_scalar_prefetch=0,
            grid=grid,
            in_specs=[
                pl.BlockSpec((1, R, chunk), lambda n, k: (n, 0, k)),
                pl.BlockSpec((1, R, chunk), lambda n, k: (n, 0, k)),
            ],
            out_specs=[
                pl.BlockSpec((1, R, 1), lambda n, k: (n, 0, 0)),
                pl.BlockSpec((1, R, 1), lambda n, k: (n, 0, 0)),
                pl.BlockSpec((1, R, 1), lambda n, k: (n, 0, 0)),
            ],
        ),
        compiler_params=pltpu.CompilerParams(
            dimension_semantics=("parallel", "arbitrary"),
            vmem_limit_bytes=vmem_limit,
        ),
        cost_estimate=cost,
    )(p2, t2)

    # Tiny per-class weighted combine (C elements) in plain JAX.
    def _per_class(x):  # (NB, bn*Cp, 1) -> (C,)
        return x.reshape(NB, bn, C, pack).sum(axis=(0, 1, 3))

    inter = _per_class(inter_p)
    sum_p = _per_class(sump_p)
    sum_t = _per_class(sumt_p)
    union = sum_t + sum_p - inter
    prop_class = sum_t / jnp.float32(total)
    return jnp.sum(prop_class * inter / (union + jnp.float32(smooth)))


def _reference(preds, targets, smooth=1e-07):
    p = preds.astype(jnp.float32)
    t = targets.astype(jnp.float32)
    inter = jnp.sum(t * p, axis=(0, 2, 3))
    union = jnp.sum(t, axis=(0, 2, 3)) + jnp.sum(p, axis=(0, 2, 3)) - inter
    prop_class = jnp.mean(t, axis=(0, 2, 3))
    return jnp.sum(prop_class * inter / (union + smooth))


if __name__ == "__main__":
    key = jax.random.PRNGKey(0)
    k1, k2, k3, k4 = jax.random.split(key, 4)

    # Small canonical shape (default fast path: full-row chunks, no mask).
    N, C, H, W = 2, 4, 16, 16
    preds = jax.random.uniform(k1, (N, C, H, W), dtype=jnp.float32)
    targets = (jax.random.uniform(k2, (N, C, H, W)) > 0.5).astype(jnp.float32)

    out = weight_jaccard_index(preds, targets)
    out = jax.block_until_ready(out)
    ref = _reference(preds, targets)
    assert jnp.allclose(out, ref, rtol=1e-5, atol=1e-6), (out, ref)

    # Second check: force the ragged last lane-chunk (in-kernel tail mask) path
    # with a tiny explicit block budget and a spatial extent not a multiple of 128.
    N2, C2, H2, W2 = 2, 4, 50, 50
    preds2 = jax.random.uniform(k3, (N2, C2, H2, W2), dtype=jnp.float32)
    targets2 = (jax.random.uniform(k4, (N2, C2, H2, W2)) > 0.5).astype(jnp.float32)

    out2 = weight_jaccard_index(preds2, targets2, block_bytes=16 * 1024)
    out2 = jax.block_until_ready(out2)
    ref2 = _reference(preds2, targets2)
    assert jnp.allclose(out2, ref2, rtol=1e-5, atol=1e-6), (out2, ref2)

    print("KERNEL_OK")
</pallas_src>

<mosaic_0001>
module attributes {stable_mosaic.version = 11 : i64} {
  func.func @_jaccard_sums_kernel(%arg0: i32, %arg1: i32, %arg2: memref<1x8x128xf32, #tpu.memory_space<vmem>>, %arg3: memref<1x8x128xf32, #tpu.memory_space<vmem>>, %arg4: memref<1x8x1xf32, #tpu.memory_space<vmem>>, %arg5: memref<1x8x1xf32, #tpu.memory_space<vmem>>, %arg6: memref<1x8x1xf32, #tpu.memory_space<vmem>>) attributes {dimension_semantics = [#tpu.dimension_semantics<parallel>, #tpu.dimension_semantics<arbitrary>], iteration_bounds = array<i64: 2, 1>, scalar_prefetch = 0 : i64, scratch_operands = 0 : i64, tpu.core_type = #tpu.core_type<tc>, window_params = [{transform_indices = @transform_0, window_bounds = array<i64: 1, 8, 128>}, {transform_indices = @transform_1, window_bounds = array<i64: 1, 8, 128>}, {transform_indices = @transform_2, window_bounds = array<i64: 1, 8, 1>}, {transform_indices = @transform_3, window_bounds = array<i64: 1, 8, 1>}, {transform_indices = @transform_4, window_bounds = array<i64: 1, 8, 1>}]} {
    %c0_i32 = arith.constant 0 : i32
    %0 = arith.cmpi eq, %arg1, %c0_i32 : i32
    %1 = arith.extui %0 : i1 to i32
    %c0_i32_0 = arith.constant 0 : i32
    %2 = arith.cmpi ne, %1, %c0_i32_0 : i32
    scf.if %2 {
      %cst_26 = arith.constant 0.000000e+00 : f32
      %21 = vector.broadcast %cst_26 : f32 to vector<1x8x1xf32>
      %c0_27 = arith.constant 0 : index
      %c0_28 = arith.constant 0 : index
      %c0_29 = arith.constant 0 : index
      %22 = vector.load %arg4[%c0_27, %c0_28, %c0_29] : memref<1x8x1xf32, #tpu.memory_space<vmem>>, vector<1x8x1xf32>
      tpu.vector_store %arg4[%c0_27, %c0_28, %c0_29], %21 {strides = array<i32>} : memref<1x8x1xf32, #tpu.memory_space<vmem>>, vector<1x8x1xf32>,
      %cst_30 = arith.constant 0.000000e+00 : f32
      %23 = vector.broadcast %cst_30 : f32 to vector<1x8x1xf32>
      %c0_31 = arith.constant 0 : index
      %c0_32 = arith.constant 0 : index
      %c0_33 = arith.constant 0 : index
      %24 = vector.load %arg5[%c0_31, %c0_32, %c0_33] : memref<1x8x1xf32, #tpu.memory_space<vmem>>, vector<1x8x1xf32>
      tpu.vector_store %arg5[%c0_31, %c0_32, %c0_33], %23 {strides = array<i32>} : memref<1x8x1xf32, #tpu.memory_space<vmem>>, vector<1x8x1xf32>,
      %cst_34 = arith.constant 0.000000e+00 : f32
      %25 = vector.broadcast %cst_34 : f32 to vector<1x8x1xf32>
      %c0_35 = arith.constant 0 : index
      %c0_36 = arith.constant 0 : index
      %c0_37 = arith.constant 0 : index
      %26 = vector.load %arg6[%c0_35, %c0_36, %c0_37] : memref<1x8x1xf32, #tpu.memory_space<vmem>>, vector<1x8x1xf32>
      tpu.vector_store %arg6[%c0_35, %c0_36, %c0_37], %25 {strides = array<i32>} : memref<1x8x1xf32, #tpu.memory_space<vmem>>, vector<1x8x1xf32>,
    } else {
    }
    %c0 = arith.constant 0 : index
    %c0_1 = arith.constant 0 : index
    %c0_2 = arith.constant 0 : index
    %3 = vector.load %arg2[%c0, %c0_1, %c0_2] : memref<1x8x128xf32, #tpu.memory_space<vmem>>, vector<1x8x128xf32>
    %c0_3 = arith.constant 0 : index
    %c0_4 = arith.constant 0 : index
    %c0_5 = arith.constant 0 : index
    %4 = vector.load %arg3[%c0_3, %c0_4, %c0_5] : memref<1x8x128xf32, #tpu.memory_space<vmem>>, vector<1x8x128xf32>
    %c0_6 = arith.constant 0 : index
    %c0_7 = arith.constant 0 : index
    %c0_8 = arith.constant 0 : index
    %5 = vector.load %arg4[%c0_6, %c0_7, %c0_8] : memref<1x8x1xf32, #tpu.memory_space<vmem>>, vector<1x8x1xf32>
    %6 = arith.mulf %4, %3 : vector<1x8x128xf32>
    %cst = arith.constant dense<0.000000e+00> : vector<1x8xf32>
    %7 = vector.multi_reduction <add>, %6, %cst [2] : vector<1x8x128xf32> to vector<1x8xf32>
    %8 = vector.shape_cast %7 : vector<1x8xf32> to vector<1x8x1xf32>
    %9 = arith.addf %5, %8 : vector<1x8x1xf32>
    %c0_9 = arith.constant 0 : index
    %c0_10 = arith.constant 0 : index
    %c0_11 = arith.constant 0 : index
    %10 = vector.load %arg4[%c0_9, %c0_10, %c0_11] : memref<1x8x1xf32, #tpu.memory_space<vmem>>, vector<1x8x1xf32>
    tpu.vector_store %arg4[%c0_9, %c0_10, %c0_11], %9 {strides = array<i32>} : memref<1x8x1xf32, #tpu.memory_space<vmem>>, vector<1x8x1xf32>,
    %c0_12 = arith.constant 0 : index
    %c0_13 = arith.constant 0 : index
    %c0_14 = arith.constant 0 : index
    %11 = vector.load %arg5[%c0_12, %c0_13, %c0_14] : memref<1x8x1xf32, #tpu.memory_space<vmem>>, vector<1x8x1xf32>
    %cst_15 = arith.constant dense<0.000000e+00> : vector<1x8xf32>
    %12 = vector.multi_reduction <add>, %3, %cst_15 [2] : vector<1x8x128xf32> to vector<1x8xf32>
    %13 = vector.shape_cast %12 : vector<1x8xf32> to vector<1x8x1xf32>
    %14 = arith.addf %11, %13 : vector<1x8x1xf32>
    %c0_16 = arith.constant 0 : index
    %c0_17 = arith.constant 0 : index
    %c0_18 = arith.constant 0 : index
    %15 = vector.load %arg5[%c0_16, %c0_17, %c0_18] : memref<1x8x1xf32, #tpu.memory_space<vmem>>, vector<1x8x1xf32>
    tpu.vector_store %arg5[%c0_16, %c0_17, %c0_18], %14 {strides = array<i32>} : memref<1x8x1xf32, #tpu.memory_space<vmem>>, vector<1x8x1xf32>,
    %c0_19 = arith.constant 0 : index
    %c0_20 = arith.constant 0 : index
    %c0_21 = arith.constant 0 : index
    %16 = vector.load %arg6[%c0_19, %c0_20, %c0_21] : memref<1x8x1xf32, #tpu.memory_space<vmem>>, vector<1x8x1xf32>
    %cst_22 = arith.constant dense<0.000000e+00> : vector<1x8xf32>
    %17 = vector.multi_reduction <add>, %4, %cst_22 [2] : vector<1x8x128xf32> to vector<1x8xf32>
    %18 = vector.shape_cast %17 : vector<1x8xf32> to vector<1x8x1xf32>
    %19 = arith.addf %16, %18 : vector<1x8x1xf32>
    %c0_23 = arith.constant 0 : index
    %c0_24 = arith.constant 0 : index
    %c0_25 = arith.constant 0 : index
    %20 = vector.load %arg6[%c0_23, %c0_24, %c0_25] : memref<1x8x1xf32, #tpu.memory_space<vmem>>, vector<1x8x1xf32>
    tpu.vector_store %arg6[%c0_23, %c0_24, %c0_25], %19 {strides = array<i32>} : memref<1x8x1xf32, #tpu.memory_space<vmem>>, vector<1x8x1xf32>,
    return
  }
  func.func @transform_0(%arg0: i32, %arg1: i32) -> (i32, i32, i32) {
    %c0_i32 = arith.constant 0 : i32
    %c0_i32_0 = arith.constant 0 : i32
    return %arg0, %c0_i32, %arg1 : i32, i32, i32
  }
  func.func @transform_1(%arg0: i32, %arg1: i32) -> (i32, i32, i32) {
    %c0_i32 = arith.constant 0 : i32
    %c0_i32_0 = arith.constant 0 : i32
    return %arg0, %c0_i32, %arg1 : i32, i32, i32
  }
  func.func @transform_2(%arg0: i32, %arg1: i32) -> (i32, i32, i32) {
    %c0_i32 = arith.constant 0 : i32
    %c0_i32_0 = arith.constant 0 : i32
    %c0_i32_1 = arith.constant 0 : i32
    return %arg0, %c0_i32, %c0_i32_0 : i32, i32, i32
  }
  func.func @transform_3(%arg0: i32, %arg1: i32) -> (i32, i32, i32) {
    %c0_i32 = arith.constant 0 : i32
    %c0_i32_0 = arith.constant 0 : i32
    %c0_i32_1 = arith.constant 0 : i32
    return %arg0, %c0_i32, %c0_i32_0 : i32, i32, i32
  }
  func.func @transform_4(%arg0: i32, %arg1: i32) -> (i32, i32, i32) {
    %c0_i32 = arith.constant 0 : i32
    %c0_i32_0 = arith.constant 0 : i32
    %c0_i32_1 = arith.constant 0 : i32
    return %arg0, %c0_i32, %c0_i32_0 : i32, i32, i32
  }
}

</mosaic_0001>

<llo_original>
// kernel: tpu_custom_call.1
$region0: #{tpu_custom_call.1}
  #allocation0 [shape = 'u32[]', space=smem, size = 0x4, offset = 0x4, fixed_abs, tag = 'smem constant byte address 0x4 - core index']
  #allocation1 [shape = 'u32[144,128]{1,0:T(1,128)}', space=vmem, size = 0x12000, scoped, tag = 'internal scratch']
  %s0 = inlined_call_operand.hbm [shape: f32[2,8,128], index: 0, kind: input, shape index: {}]
  %s1 = inlined_call_operand.hbm [shape: f32[2,8,128], index: 1, kind: input, shape index: {}]
  %s2 = inlined_call_operand.vmem [shape: f32[2,8,1], index: 2, kind: output, shape index: {0}]
  %s3 = inlined_call_operand.vmem [shape: f32[2,8,1], index: 3, kind: output, shape index: {1}]
  %s4 = inlined_call_operand.vmem [shape: f32[2,8,1], index: 4, kind: output, shape index: {2}]
  %5 = xla_tuple %s2, %s3, %s4
  %s6 = sld [smem:[#allocation0]]
  $region69: #{tpu_custom_call.1} parent=0
    _
  %s8 = ssub.s32 1, %s6
  %s9 = scalar_select 0, %s8, %s6
  $region1: #{tpu_custom_call.1} parent=0
    #allocation2 [shape = 'u8[8192]{0}', space=vmem, size = 0x2000, scoped, tag = 'input window, operand 0']
    #allocation3 [shape = 's32[2]{0}', space=sflag, size = 0x8, scoped, tag = 'scoped memory for tpu_custom_call.1']
    #allocation4 [shape = 'u8[8192]{0}', space=vmem, size = 0x2000, scoped, tag = 'input window, operand 1']
    #allocation5 [shape = 's32[2]{0}', space=sflag, size = 0x8, scoped, tag = 'scoped memory for tpu_custom_call.1']
    %10 = vsyncpa [#allocation3], 0
    %s11 = scalar_lea.sflag [#allocation3], 1
    %12 = vsyncpa %s11, 0
    %13 = vsyncpa [#allocation5], 0
    %s14 = scalar_lea.sflag [#allocation5], 1
    %15 = vsyncpa %s14, 0
    loop: start=0, step=1, limit=4
    $region2: #{tpu_custom_call.1} parent=1 // loop_pre_header
      _
    $region3: #{tpu_custom_call.1} parent=1 // loop_header
      %s17 = sphi 0, %s21
      %p18 = scmp.ge.s32.totalorder %s17, 4
      %s24 = sphi 0, %s36
      %s25 = sphi 0, %s32
      %s26 = sphi 0, %s24
      %s27 = sphi 0, %s25
      %s28 = sphi 0, %s26
      %s29 = sphi 0, %s27
      %s41 = sphi 0, %s43
      %s44 = sphi 0, %s41
      %s45 = sphi 0, %s44
      %s61 = sphi 0, %s45
      %s69 = sphi 0, %s71
      %s72 = sphi 0, %s69
      %s73 = sphi 0, %s72
      %s89 = sphi 0, %s73
      %s95 = sphi 0, %s97
      %s98 = sphi 0, %s95
      %s99 = sphi 0, %s98
      %s115 = sphi 0, %s99
      %s121 = sphi 0, %s123
      %s124 = sphi 0, %s121
      %s125 = sphi 0, %s124
      %s141 = sphi 0, %s125
      %s147 = sphi 0, %s149
      %s150 = sphi 0, %s147
      %s151 = sphi 0, %s150
      %s167 = sphi 0, %s151
    $region4: #{tpu_custom_call.1} parent=1 // loop_header_branch
      %20 = sbr.rel (%p18) target = $region8
    $region5: #{tpu_custom_call.1} parent=1 // loop_body
      %s22 = ssub.s32 %s17, 1
      %s23 = ssub.s32 %s17, 2
      %s30 = sadd.s32 1, %s25
      %p31 = scmp.ge.s32.totalorder %s30, 1
      %s32 = scalar_select %p31, 0, %s30
      %s33 = sadd.s32 1, %s24
      %s34 = scalar_select %p31, %s33, %s24
      %p35 = scmp.ge.s32.totalorder %s34, 2
      %s36 = scalar_select %p35, 0, %s34
      %s37 = ssub.s32 %s24, %s36
      %s38 = ssub.s32 %s25, %s32
      %s39 = sor.u32 %s37, %s38
      %p40 = scmp.eq.s32.totalorder %s39, 0
      %s42 = sadd.s32 %s41, 1
      %s43 = scalar_select %p40, %s41, %s42
      %p46 = pneg %p40
      %p47 = scmp.eq.s32.totalorder %s17, 1
      %p48 = por %p46, %p47
      %p49 = scmp.ne.s32.totalorder %s41, %s44
      %p50 = scmp.eq.s32.totalorder %s17, 0
      %p51 = por %p49, %p50
      %p52 = scmp.ne.s32.totalorder %s41, %s44
      %p53 = scmp.eq.s32.totalorder %s22, 1
      %p54 = por %p52, %p53
      %p55 = scmp.ne.s32.totalorder %s44, %s45
      %p56 = scmp.eq.s32.totalorder %s22, 0
      %p57 = por %p55, %p56
      %p58 = scmp.ne.s32.totalorder %s44, %s45
      %p59 = scmp.eq.s32.totalorder %s23, 1
      %p60 = por %p58, %p59
      %p62 = scmp.ne.s32.totalorder %s45, %s61
      %p63 = scmp.eq.s32.totalorder %s23, 0
      %p64 = por %p62, %p63
      %s65 = ssub.s32 %s24, %s36
      %s66 = ssub.s32 %s25, %s32
      %s67 = sor.u32 %s65, %s66
      %p68 = scmp.eq.s32.totalorder %s67, 0
      %s70 = sadd.s32 %s69, 1
      %s71 = scalar_select %p68, %s69, %s70
      %p74 = pneg %p68
      %p75 = scmp.eq.s32.totalorder %s17, 1
      %p76 = por %p74, %p75
      %p77 = scmp.ne.s32.totalorder %s69, %s72
      %p78 = scmp.eq.s32.totalorder %s17, 0
      %p79 = por %p77, %p78
      %p80 = scmp.ne.s32.totalorder %s69, %s72
      %p81 = scmp.eq.s32.totalorder %s22, 1
      %p82 = por %p80, %p81
      %p83 = scmp.ne.s32.totalorder %s72, %s73
      %p84 = scmp.eq.s32.totalorder %s22, 0
      %p85 = por %p83, %p84
      %p86 = scmp.ne.s32.totalorder %s72, %s73
      %p87 = scmp.eq.s32.totalorder %s23, 1
      %p88 = por %p86, %p87
      %p90 = scmp.ne.s32.totalorder %s73, %s89
      %p91 = scmp.eq.s32.totalorder %s23, 0
      %p92 = por %p90, %p91
      %s93 = ssub.s32 %s24, %s36
      %p94 = scmp.eq.s32.totalorder %s93, 0
      %s96 = sadd.s32 %s95, 1
      %s97 = scalar_select %p94, %s95, %s96
      %p100 = pneg %p94
      %p101 = scmp.eq.s32.totalorder %s17, 1
      %p102 = por %p100, %p101
      %p103 = scmp.ne.s32.totalorder %s95, %s98
      %p104 = scmp.eq.s32.totalorder %s17, 0
      %p105 = por %p103, %p104
      %p106 = scmp.ne.s32.totalorder %s95, %s98
      %p107 = scmp.eq.s32.totalorder %s22, 1
      %p108 = por %p106, %p107
      %p109 = scmp.ne.s32.totalorder %s98, %s99
      %p110 = scmp.eq.s32.totalorder %s22, 0
      %p111 = por %p109, %p110
      %p112 = scmp.ne.s32.totalorder %s98, %s99
      %p113 = scmp.eq.s32.totalorder %s23, 1
      %p114 = por %p112, %p113
      %p116 = scmp.ne.s32.totalorder %s99, %s115
      %p117 = scmp.eq.s32.totalorder %s23, 0
      %p118 = por %p116, %p117
      %s119 = ssub.s32 %s24, %s36
      %p120 = scmp.eq.s32.totalorder %s119, 0
      %s122 = sadd.s32 %s121, 1
      %s123 = scalar_select %p120, %s121, %s122
      %p126 = pneg %p120
      %p127 = scmp.eq.s32.totalorder %s17, 1
      %p128 = por %p126, %p127
      %p129 = scmp.ne.s32.totalorder %s121, %s124
      %p130 = scmp.eq.s32.totalorder %s17, 0
      %p131 = por %p129, %p130
      %p132 = scmp.ne.s32.totalorder %s121, %s124
      %p133 = scmp.eq.s32.totalorder %s22, 1
      %p134 = por %p132, %p133
      %p135 = scmp.ne.s32.totalorder %s124, %s125
      %p136 = scmp.eq.s32.totalorder %s22, 0
      %p137 = por %p135, %p136
      %p138 = scmp.ne.s32.totalorder %s124, %s125
      %p139 = scmp.eq.s32.totalorder %s23, 1
      %p140 = por %p138, %p139
      %p142 = scmp.ne.s32.totalorder %s125, %s141
      %p143 = scmp.eq.s32.totalorder %s23, 0
      %p144 = por %p142, %p143
      %s145 = ssub.s32 %s24, %s36
      %p146 = scmp.eq.s32.totalorder %s145, 0
      %s148 = sadd.s32 %s147, 1
      %s149 = scalar_select %p146, %s147, %s148
      %p152 = pneg %p146
      %p153 = scmp.eq.s32.totalorder %s17, 1
      %p154 = por %p152, %p153
      %p155 = scmp.ne.s32.totalorder %s147, %s150
      %p156 = scmp.eq.s32.totalorder %s17, 0
      %p157 = por %p155, %p156
      %p158 = scmp.ne.s32.totalorder %s147, %s150
      %p159 = scmp.eq.s32.totalorder %s22, 1
      %p160 = por %p158, %p159
      %p161 = scmp.ne.s32.totalorder %s150, %s151
      %p162 = scmp.eq.s32.totalorder %s22, 0
      %p163 = por %p161, %p162
      %p164 = scmp.ne.s32.totalorder %s150, %s151
      %p165 = scmp.eq.s32.totalorder %s23, 1
      %p166 = por %p164, %p165
      %p168 = scmp.ne.s32.totalorder %s151, %s167
      %p169 = scmp.eq.s32.totalorder %s23, 0
      %p170 = por %p168, %p169
      %p171 = scmp.le.s32.totalorder 1, %s17
      %p172 = scmp.lt.s32.totalorder %s17, 3
      %p173 = pnand %p171, %p172
      %p174 = pneg %p173
      // Predicated region
      $region9: #{tpu_custom_call.1} parent=5 // pred_check
        _
      $region10: #{tpu_custom_call.1} parent=5 // pred_check_branch
        %176 = sbr.rel (%p173) target = $region12
      $region11: #{tpu_custom_call.1} parent=5 // pred_region
        %s177 = ssub.s32 %s17, 1
      $region12: #{tpu_custom_call.1} parent=5 // pred_fallthru
        _
      %p178 = scmp.lt.s32.totalorder %s17, 2
      // Predicated region
      $region13: #{tpu_custom_call.1} parent=5 // pred_check
        %p179 = pneg %p178
      $region14: #{tpu_custom_call.1} parent=5 // pred_check_branch
        %181 = sbr.rel (%p179) target = $region16
      $region15: #{tpu_custom_call.1} parent=5 // pred_region
        // Predicated region
        $region17: #{tpu_custom_call.1} parent=15 // pred_check
          %p182 = pneg %p51
        $region18: #{tpu_custom_call.1} parent=15 // pred_check_branch
          %184 = sbr.rel (%p182) target = $region20
        $region19: #{tpu_custom_call.1} parent=15 // pred_region
          %s185 = sand.u32 %s41, 1
          %s186 = scalar_lea.sflag [#allocation3], %s185
          %s187 = sand.u32 %s41, 1
          %s188 = smul.addr %s187, 8
          %s189 = scalar_lea.vmem [#allocation2], %s188
          %s191 = ssub.s32 128, 128
          %192 = vsyncadd %s186, %s191
          %s193 = sadd.s32 %s25, %s24
          %s194 = smul.addr %s193, 128
          %s195 = scalar_lea.hbm %s0, %s194
          %s197 = sshll.u32 %s189, 4
          %s198 = int_to_ptr.vmem [resolvable:$true] %s197
          %200 = dma.hbm_to_vmem [thread:$0]  %s195, 128, %s198, %s186
        $region20: #{tpu_custom_call.1} parent=15 // pred_fallthru
          _
        // Predicated region
        $region21: #{tpu_custom_call.1} parent=15 // pred_check
          %p201 = pneg %p79
        $region22: #{tpu_custom_call.1} parent=15 // pred_check_branch
          %203 = sbr.rel (%p201) target = $region24
        $region23: #{tpu_custom_call.1} parent=15 // pred_region
          %s204 = sand.u32 %s69, 1
          %s205 = scalar_lea.sflag [#allocation5], %s204
          %s206 = sand.u32 %s69, 1
          %s207 = smul.addr %s206, 8
          %s208 = scalar_lea.vmem [#allocation4], %s207
          %s210 = ssub.s32 128, 128
          %211 = vsyncadd %s205, %s210
          %s212 = sadd.s32 %s25, %s24
          %s213 = smul.addr %s212, 128
          %s214 = scalar_lea.hbm %s1, %s213
          %s216 = sshll.u32 %s208, 4
          %s217 = int_to_ptr.vmem [resolvable:$true] %s216
          %219 = dma.hbm_to_vmem [thread:$0]  %s214, 128, %s217, %s205
        $region24: #{tpu_custom_call.1} parent=15 // pred_fallthru
          _
      $region16: #{tpu_custom_call.1} parent=5 // pred_fallthru
        _
      %p220 = scmp.le.s32.totalorder 1, %s17
      %p221 = scmp.lt.s32.totalorder %s17, 3
      %p222 = pnand %p220, %p221
      %p223 = pneg %p222
      // Predicated region
      $region25: #{tpu_custom_call.1} parent=5 // pred_check
        _
      $region26: #{tpu_custom_call.1} parent=5 // pred_check_branch
        %225 = sbr.rel (%p222) target = $region28
      $region27: #{tpu_custom_call.1} parent=5 // pred_region
        %s226 = ssub.s32 %s17, 1
        %s227 = sand.u32 %s44, 1
        %s228 = scalar_lea.sflag [#allocation3], %s227
        %s229 = sand.u32 %s44, 1
        %s230 = smul.addr %s229, 8
        %s231 = scalar_lea.vmem [#allocation2], %s230
        // Predicated region
        $region29: #{tpu_custom_call.1} parent=27 // pred_check
          %p232 = pneg %p57
        $region30: #{tpu_custom_call.1} parent=27 // pred_check_branch
          %234 = sbr.rel (%p232) target = $region32
        $region31: #{tpu_custom_call.1} parent=27 // pred_region
          %235 = dma.done %s228, 128
        $region32: #{tpu_custom_call.1} parent=27 // pred_fallthru
          _
        %s236 = sand.u32 %s72, 1
        %s237 = scalar_lea.sflag [#allocation5], %s236
        %s238 = sand.u32 %s72, 1
        %s239 = smul.addr %s238, 8
        %s240 = scalar_lea.vmem [#allocation4], %s239
        // Predicated region
        $region33: #{tpu_custom_call.1} parent=27 // pred_check
          %p241 = pneg %p85
        $region34: #{tpu_custom_call.1} parent=27 // pred_check_branch
          %243 = sbr.rel (%p241) target = $region36
        $region35: #{tpu_custom_call.1} parent=27 // pred_region
          %244 = dma.done %s237, 128
        $region36: #{tpu_custom_call.1} parent=27 // pred_fallthru
          _
        %s245 = sand.u32 %s44, 1
        %s246 = scalar_lea.sflag [#allocation3], %s245
        %s247 = sand.u32 %s44, 1
        %s248 = smul.addr %s247, 8
        %s249 = scalar_lea.vmem [#allocation2], %s248
        %p250 = pneg %p57
        %p251 = pneg %p54
        %s252 = sand.u32 %s72, 1
        %s253 = scalar_lea.sflag [#allocation5], %s252
        %s254 = sand.u32 %s72, 1
        %s255 = smul.addr %s254, 8
        %s256 = scalar_lea.vmem [#allocation4], %s255
        %p257 = pneg %p85
        %p258 = pneg %p82
        %p259 = pneg %p111
        %p260 = pneg %p108
        %p261 = scmp.lt.s32.totalorder %s26, 1
        %s262 = scalar_select %p261, %s26, 1
        %s263 = smul.addr %s262, 8
        %s264 = scalar_lea.vmem %s2, %s263
        %p265 = pneg %p137
        %p266 = pneg %p134
        %p267 = scmp.lt.s32.totalorder %s26, 1
        %s268 = scalar_select %p267, %s26, 1
        %s269 = smul.addr %s268, 8
        %s270 = scalar_lea.vmem %s3, %s269
        %p271 = pneg %p163
        %p272 = pneg %p160
        %p273 = scmp.lt.s32.totalorder %s26, 1
        %s274 = scalar_select %p273, %s26, 1
        %s275 = smul.addr %s274, 8
        %s276 = scalar_lea.vmem %s4, %s275
        %p277 = scmp.lt.s32.totalorder %s26, 1
        %s278 = scalar_select %p277, %s26, 1
        %s279 = smul.addr %s278, 8
        %s280 = scalar_lea.vmem %s2, %s279
        %p281 = scmp.lt.s32.totalorder %s26, 1
        %s282 = scalar_select %p281, %s26, 1
        %s283 = smul.addr %s282, 8
        %s284 = scalar_lea.vmem %s3, %s283
        %p285 = scmp.lt.s32.totalorder %s26, 1
        %s286 = scalar_select %p285, %s26, 1
        %s287 = smul.addr %s286, 8
        %s288 = scalar_lea.vmem %s4, %s287
        %p289 = scmp.eq.s32.totalorder %s27, 0
        // Predicated region
        $region37: #{tpu_custom_call.1} parent=27 // pred_check
          %p290 = pneg %p289
        $region38: #{tpu_custom_call.1} parent=27 // pred_check_branch
          %292 = sbr.rel (%p290) target = $region40
        $region39: #{tpu_custom_call.1} parent=27 // pred_region
          %vm293 = vcmask 7168
          %294 = vst.msk [vmem:[%s280] sm:$0xff] %vm293, 0.0
          %295 = vst.msk [vmem:[%s284] sm:$0xff] %vm293, 0.0
          %296 = vst.msk [vmem:[%s288] sm:$0xff] %vm293, 0.0
        $region40: #{tpu_custom_call.1} parent=27 // pred_fallthru
          _
        %v297 = vld [vmem:[%s231] sm:$0xff]
        %v298 = vld [vmem:[%s240] sm:$0xff]
        %v299 = vld [vmem:[%s280] sm:$0xff]
        %v300 = vmul.f32 %v298, %v297
        %301 = vadd.xlane.f32.xlu0 %v300
        %v302 = vpop.xlane.xlu0 %301
        %v303 = vadd.f32 %v299, %v302
        %vm304 = vcmask 7168
        %305 = vst.msk [vmem:[%s280] sm:$0xff] %vm304, %v303
        %v306 = vld [vmem:[%s284] sm:$0xff]
        %307 = vadd.xlane.f32.xlu0 %v297
        %v308 = vpop.xlane.xlu0 %307
        %v309 = vadd.f32 %v306, %v308
        %310 = vst.msk [vmem:[%s284] sm:$0xff] %vm304, %v309
        %v311 = vld [vmem:[%s288] sm:$0xff]
        %312 = vadd.xlane.f32.xlu0 %v298
        %v313 = vpop.xlane.xlu0 %312
        %v314 = vadd.f32 %v311, %v313
        %315 = vst.msk [vmem:[%s288] sm:$0xff] %vm304, %v314
        %p316 = scmp.lt.s32.totalorder %s26, 1
        %s317 = scalar_select %p316, %s26, 1
        %s318 = smul.addr %s317, 8
        %s319 = scalar_lea.vmem %s2, %s318
        %p320 = scmp.lt.s32.totalorder %s26, 1
        %s321 = scalar_select %p320, %s26, 1
        %s322 = smul.addr %s321, 8
        %s323 = scalar_lea.vmem %s3, %s322
        %p324 = scmp.lt.s32.totalorder %s26, 1
        %s325 = scalar_select %p324, %s26, 1
        %s326 = smul.addr %s325, 8
        %s327 = scalar_lea.vmem %s4, %s326
        // Predicated region
        $region41: #{tpu_custom_call.1} parent=27 // pred_check
          %p328 = pneg %p108
        $region42: #{tpu_custom_call.1} parent=27 // pred_check_branch
          %330 = sbr.rel (%p328) target = $region44
        $region43: #{tpu_custom_call.1} parent=27 // pred_region
          _
        $region44: #{tpu_custom_call.1} parent=27 // pred_fallthru
          _
        // Predicated region
        $region45: #{tpu_custom_call.1} parent=27 // pred_check
          %p331 = pneg %p134
        $region46: #{tpu_custom_call.1} parent=27 // pred_check_branch
          %333 = sbr.rel (%p331) target = $region48
        $region47: #{tpu_custom_call.1} parent=27 // pred_region
          _
        $region48: #{tpu_custom_call.1} parent=27 // pred_fallthru
          _
        // Predicated region
        $region49: #{tpu_custom_call.1} parent=27 // pred_check
          %p334 = pneg %p160
        $region50: #{tpu_custom_call.1} parent=27 // pred_check_branch
          %336 = sbr.rel (%p334) target = $region52
        $region51: #{tpu_custom_call.1} parent=27 // pred_region
          _
        $region52: #{tpu_custom_call.1} parent=27 // pred_fallthru
          _
      $region28: #{tpu_custom_call.1} parent=5 // pred_fallthru
        _
      %p337 = scmp.le.s32.totalorder 2, %s17
      // Predicated region
      $region53: #{tpu_custom_call.1} parent=5 // pred_check
        %p338 = pneg %p337
      $region54: #{tpu_custom_call.1} parent=5 // pred_check_branch
        %340 = sbr.rel (%p338) target = $region56
      $region55: #{tpu_custom_call.1} parent=5 // pred_region
        %s341 = ssub.s32 %s17, 2
        // Predicated region
        $region57: #{tpu_custom_call.1} parent=55 // pred_check
          %p342 = pneg %p114
        $region58: #{tpu_custom_call.1} parent=55 // pred_check_branch
          %344 = sbr.rel (%p342) target = $region60
        $region59: #{tpu_custom_call.1} parent=55 // pred_region
          %p345 = scmp.lt.s32.totalorder %s28, 1
          %s346 = scalar_select %p345, %s28, 1
          %s347 = smul.addr %s346, 8
          %s348 = scalar_lea.vmem %s2, %s347
        $region60: #{tpu_custom_call.1} parent=55 // pred_fallthru
          _
        // Predicated region
        $region61: #{tpu_custom_call.1} parent=55 // pred_check
          %p349 = pneg %p140
        $region62: #{tpu_custom_call.1} parent=55 // pred_check_branch
          %351 = sbr.rel (%p349) target = $region64
        $region63: #{tpu_custom_call.1} parent=55 // pred_region
          %p352 = scmp.lt.s32.totalorder %s28, 1
          %s353 = scalar_select %p352, %s28, 1
          %s354 = smul.addr %s353, 8
          %s355 = scalar_lea.vmem %s3, %s354
        $region64: #{tpu_custom_call.1} parent=55 // pred_fallthru
          _
        // Predicated region
        $region65: #{tpu_custom_call.1} parent=55 // pred_check
          %p356 = pneg %p166
        $region66: #{tpu_custom_call.1} parent=55 // pred_check_branch
          %358 = sbr.rel (%p356) target = $region68
        $region67: #{tpu_custom_call.1} parent=55 // pred_region
          %p359 = scmp.lt.s32.totalorder %s28, 1
          %s360 = scalar_select %p359, %s28, 1
          %s361 = smul.addr %s360, 8
          %s362 = scalar_lea.vmem %s4, %s361
        $region68: #{tpu_custom_call.1} parent=55 // pred_fallthru
          _
      $region56: #{tpu_custom_call.1} parent=5 // pred_fallthru
        _
    $region6: #{tpu_custom_call.1} parent=1 // loop_footer
      %s21 = sadd.s32 1, %s17
    $region7: #{tpu_custom_call.1} parent=1 // loop_footer_branch
      %16 = sbr.rel target = $region3
    $region8: #{tpu_custom_call.1} parent=1 // loop_exit
      _
    %363 = vsyncpa [#allocation3], 1
    %s364 = scalar_lea.sflag [#allocation3], 1
    %365 = vsyncpa %s364, 1
    %366 = vsyncpa [#allocation5], 1
    %s367 = scalar_lea.sflag [#allocation5], 1
    %368 = vsyncpa %s367, 1

</llo_original>
